<compile_context>
chip_gen: v7x
topology: tpu7x:2x2x1
jax: 0.10.0
libtpu: 0.0.40
codegen_flags: <defaults>
</compile_context>

<pallas_src>
import functools

import jax
import jax.numpy as jnp
from jax.experimental import pallas as pl
from jax.experimental.pallas import tpu as pltpu


def _merger_kernel(w_ref, x_ref, o_ref, *, head):
    # w_ref: [1, head*fea]   raw (un-normalized) Merger weight
    # x_ref: [tb, head*fea]  batch tile, heads flattened onto the lane axis
    # o_ref: [tb, fea]
    tb, fea = o_ref.shape

    # ---- softmax(weight) over the head axis, in-kernel, f32, numerically
    #      stabilized with a running max.  `head` is a small static int, so
    #      this is an unrolled chain of [1, fea] VPU/EUP ops (hidden under DMA).
    w = [w_ref[:, h * fea:(h + 1) * fea].astype(jnp.float32) for h in range(head)]
    m = w[0]
    for h in range(1, head):
        m = jnp.maximum(m, w[h])
    e = [jnp.exp(w[h] - m) for h in range(head)]
    denom = e[0]
    for h in range(1, head):
        denom = denom + e[h]
    inv = 1.0 / denom                     # exact divide; tiny [1, fea]
    sm = [e[h] * inv for h in range(head)]

    # ---- weighted sum over heads: lane-aligned broadcast-mul + add (VPU) ----
    acc = jnp.zeros((tb, fea), dtype=jnp.float32)
    for h in range(head):
        x_h = x_ref[:, h * fea:(h + 1) * fea].astype(jnp.float32)
        acc = acc + sm[h] * x_h
    o_ref[...] = acc.astype(o_ref.dtype)


def _pick_batch_tile(bs, row_bytes, target_bytes=4 * 1024 * 1024):
    """Largest multiple-of-8 tile <= ~target_bytes worth of rows that divides bs."""
    cap = max(8, target_bytes // max(row_bytes, 1))
    tb = min(bs, cap)
    if tb == bs:
        return bs
    tb = max(8, (tb // 8) * 8)
    while tb > 8 and bs % tb != 0:
        tb -= 8
    if bs % tb != 0:
        return bs  # fallback: single full-batch block (still legal, full dim)
    return tb


def merger_forward(x, weight, head, *, batch_tile=None):
    """x: [bs, head, fea_dim]; weight: [1, head, fea_dim] (unused if head == 1)."""
    bs, h, fea_dim = x.shape
    assert h == head
    if head == 1:
        # PyTorch path: th.squeeze(x, dim=1) — pure glue, no kernel needed.
        return jnp.squeeze(x, axis=1)

    # Flatten heads onto the lane axis (contiguous -> free reshape).
    w_flat = weight.reshape(1, head * fea_dim)
    x_flat = x.reshape(bs, head * fea_dim)

    itemsize = x.dtype.itemsize
    row_bytes = head * fea_dim * itemsize + fea_dim * itemsize   # x row + out row
    if batch_tile is None:
        tb = _pick_batch_tile(bs, row_bytes)
    else:
        tb = batch_tile
        assert bs % tb == 0, "batch_tile must divide the batch size"
        assert tb == bs or tb % 8 == 0, "batch_tile must be a multiple of 8"

    grid = (bs // tb,)
    out_shape = jax.ShapeDtypeStruct((bs, fea_dim), x.dtype)

    # Explicit VMEM budget: 2 buffers per pipelined array + slack.
    x_block_bytes = tb * head * fea_dim * itemsize
    o_block_bytes = tb * fea_dim * itemsize
    w_block_bytes = head * fea_dim * weight.dtype.itemsize
    need = 2 * (x_block_bytes + o_block_bytes + w_block_bytes)
    vmem_limit = int(min(48 * 1024 * 1024, max(2 * need, 8 * 1024 * 1024)))

    kernel = functools.partial(_merger_kernel, head=head)

    # TODO(synk): for very large fea_dim (where even tb=8 exceeds the VMEM
    # budget) add a second grid axis over fea_dim; typical agent fea_dims
    # (64-512) are handled by shrinking the batch tile.
    return pl.pallas_call(
        kernel,
        out_shape=out_shape,
        grid_spec=pltpu.PrefetchScalarGridSpec(
            num_scalar_prefetch=0,
            grid=grid,
            in_specs=[
                # raw weight: same (tiny) block for every grid step
                pl.BlockSpec((1, head * fea_dim), lambda i: (0, 0)),
                # x: tiled over batch, heads flattened into the lane axis
                pl.BlockSpec((tb, head * fea_dim), lambda i: (i, 0)),
            ],
            out_specs=pl.BlockSpec((tb, fea_dim), lambda i: (i, 0)),
        ),
        compiler_params=pltpu.CompilerParams(
            dimension_semantics=("parallel",),
            vmem_limit_bytes=vmem_limit,
        ),
    )(w_flat, x_flat)


if __name__ == "__main__":
    key = jax.random.PRNGKey(0)
    k_x, k_w, k_x1 = jax.random.split(key, 3)

    bs, head, fea_dim = 16, 4, 128
    x = jax.random.normal(k_x, (bs, head, fea_dim), dtype=jnp.float32)

    # Module init fills the weight with 1.0; also perturb it so the in-kernel
    # softmax path is non-trivially exercised.
    weight = jnp.full((1, head, fea_dim), 1.0, dtype=jnp.float32)
    weight = weight + 0.1 * jax.random.normal(k_w, weight.shape, dtype=jnp.float32)

    def ref_fn(xx, ww):
        return jnp.sum(jax.nn.softmax(ww.astype(jnp.float32), axis=1)
                       * xx.astype(jnp.float32), axis=1)

    # Explicit small tile -> grid of 2: exercises pipelining / megacore path.
    out = jax.block_until_ready(merger_forward(x, weight, head, batch_tile=8))
    ref = ref_fn(x, weight)
    assert out.shape == (bs, fea_dim)
    assert jnp.allclose(out, ref, atol=1e-4, rtol=1e-4)

    # Auto tile-selection path (single full-batch block here).
    out_auto = jax.block_until_ready(merger_forward(x, weight, head))
    assert jnp.allclose(out_auto, ref, atol=1e-4, rtol=1e-4)

    # bf16 input: accumulation happens in f32 inside the kernel, cast on store.
    x_bf16 = x.astype(jnp.bfloat16)
    out_bf16 = jax.block_until_ready(merger_forward(x_bf16, weight, head, batch_tile=8))
    ref_bf16 = ref_fn(x_bf16, weight)
    assert out_bf16.dtype == jnp.bfloat16
    assert jnp.allclose(out_bf16.astype(jnp.float32), ref_bf16, atol=2e-2, rtol=2e-2)

    # head == 1 path (squeeze).
    x1 = jax.random.normal(k_x1, (bs, 1, fea_dim), dtype=jnp.float32)
    out1 = jax.block_until_ready(merger_forward(x1, None, 1))
    assert out1.shape == (bs, fea_dim)
    assert jnp.allclose(out1, x1[:, 0, :])

    print("KERNEL_OK")
</pallas_src>

<mosaic_0001>
module attributes {stable_mosaic.version = 11 : i64} {
  func.func @_merger_kernel(%arg0: i32, %arg1: memref<1x512xf32, #tpu.memory_space<vmem>>, %arg2: memref<8x512xf32, #tpu.memory_space<vmem>>, %arg3: memref<8x128xf32, #tpu.memory_space<vmem>>) attributes {dimension_semantics = [#tpu.dimension_semantics<parallel>], iteration_bounds = array<i64: 2>, scalar_prefetch = 0 : i64, scratch_operands = 0 : i64, tpu.core_type = #tpu.core_type<tc>, window_params = [{pipeline_mode = #tpu.pipeline_mode<synchronous>, transform_indices = @transform_0, window_bounds = array<i64: 1, 512>}, {transform_indices = @transform_1, window_bounds = array<i64: 8, 512>}, {transform_indices = @transform_2, window_bounds = array<i64: 8, 128>}]} {
    %c0 = arith.constant 0 : index
    %c0_0 = arith.constant 0 : index
    %0 = vector.load %arg1[%c0, %c0_0] : memref<1x512xf32, #tpu.memory_space<vmem>>, vector<1x128xf32>
    %c0_1 = arith.constant 0 : index
    %c128 = arith.constant 128 : index
    %1 = vector.load %arg1[%c0_1, %c128] : memref<1x512xf32, #tpu.memory_space<vmem>>, vector<1x128xf32>
    %c0_2 = arith.constant 0 : index
    %c256 = arith.constant 256 : index
    %2 = vector.load %arg1[%c0_2, %c256] : memref<1x512xf32, #tpu.memory_space<vmem>>, vector<1x128xf32>
    %c0_3 = arith.constant 0 : index
    %c384 = arith.constant 384 : index
    %3 = vector.load %arg1[%c0_3, %c384] : memref<1x512xf32, #tpu.memory_space<vmem>>, vector<1x128xf32>
    %4 = arith.maximumf %0, %1 : vector<1x128xf32>
    %5 = arith.maximumf %4, %2 : vector<1x128xf32>
    %6 = arith.maximumf %5, %3 : vector<1x128xf32>
    %7 = arith.subf %0, %6 : vector<1x128xf32>
    %8 = math.exp %7 : vector<1x128xf32>
    %9 = arith.subf %1, %6 : vector<1x128xf32>
    %10 = math.exp %9 : vector<1x128xf32>
    %11 = arith.subf %2, %6 : vector<1x128xf32>
    %12 = math.exp %11 : vector<1x128xf32>
    %13 = arith.subf %3, %6 : vector<1x128xf32>
    %14 = math.exp %13 : vector<1x128xf32>
    %15 = arith.addf %8, %10 : vector<1x128xf32>
    %16 = arith.addf %15, %12 : vector<1x128xf32>
    %17 = arith.addf %16, %14 : vector<1x128xf32>
    %cst = arith.constant 1.000000e+00 : f32
    %18 = vector.broadcast %cst : f32 to vector<1x128xf32>
    %19 = arith.divf %18, %17 : vector<1x128xf32>
    %20 = arith.mulf %8, %19 : vector<1x128xf32>
    %21 = arith.mulf %10, %19 : vector<1x128xf32>
    %22 = arith.mulf %12, %19 : vector<1x128xf32>
    %23 = arith.mulf %14, %19 : vector<1x128xf32>
    %cst_4 = arith.constant 0.000000e+00 : f32
    %24 = vector.broadcast %cst_4 : f32 to vector<8x128xf32>
    %c0_5 = arith.constant 0 : index
    %c0_6 = arith.constant 0 : index
    %25 = vector.load %arg2[%c0_5, %c0_6] : memref<8x512xf32, #tpu.memory_space<vmem>>, vector<8x128xf32>
    %26 = vector.broadcast %20 : vector<1x128xf32> to vector<8x128xf32>
    %27 = arith.mulf %26, %25 : vector<8x128xf32>
    %28 = arith.addf %24, %27 : vector<8x128xf32>
    %c0_7 = arith.constant 0 : index
    %c128_8 = arith.constant 128 : index
    %29 = vector.load %arg2[%c0_7, %c128_8] : memref<8x512xf32, #tpu.memory_space<vmem>>, vector<8x128xf32>
    %30 = vector.broadcast %21 : vector<1x128xf32> to vector<8x128xf32>
    %31 = arith.mulf %30, %29 : vector<8x128xf32>
    %32 = arith.addf %28, %31 : vector<8x128xf32>
    %c0_9 = arith.constant 0 : index
    %c256_10 = arith.constant 256 : index
    %33 = vector.load %arg2[%c0_9, %c256_10] : memref<8x512xf32, #tpu.memory_space<vmem>>, vector<8x128xf32>
    %34 = vector.broadcast %22 : vector<1x128xf32> to vector<8x128xf32>
    %35 = arith.mulf %34, %33 : vector<8x128xf32>
    %36 = arith.addf %32, %35 : vector<8x128xf32>
    %c0_11 = arith.constant 0 : index
    %c384_12 = arith.constant 384 : index
    %37 = vector.load %arg2[%c0_11, %c384_12] : memref<8x512xf32, #tpu.memory_space<vmem>>, vector<8x128xf32>
    %38 = vector.broadcast %23 : vector<1x128xf32> to vector<8x128xf32>
    %39 = arith.mulf %38, %37 : vector<8x128xf32>
    %40 = arith.addf %36, %39 : vector<8x128xf32>
    %c0_13 = arith.constant 0 : index
    %c0_14 = arith.constant 0 : index
    %41 = vector.load %arg3[%c0_13, %c0_14] : memref<8x128xf32, #tpu.memory_space<vmem>>, vector<8x128xf32>
    tpu.vector_store %arg3[%c0_13, %c0_14], %40 {strides = array<i32>} : memref<8x128xf32, #tpu.memory_space<vmem>>, vector<8x128xf32>,
    return
  }
  func.func @transform_0(%arg0: i32) -> (i32, i32) {
    %c0_i32 = arith.constant 0 : i32
    %c0_i32_0 = arith.constant 0 : i32
    %c0_i32_1 = arith.constant 0 : i32
    return %c0_i32, %c0_i32_0 : i32, i32
  }
  func.func @transform_1(%arg0: i32) -> (i32, i32) {
    %c0_i32 = arith.constant 0 : i32
    %c0_i32_0 = arith.constant 0 : i32
    return %arg0, %c0_i32 : i32, i32
  }
  func.func @transform_2(%arg0: i32) -> (i32, i32) {
    %c0_i32 = arith.constant 0 : i32
    %c0_i32_0 = arith.constant 0 : i32
    return %arg0, %c0_i32 : i32, i32
  }
}

</mosaic_0001>

<llo_original>
// kernel: tpu_custom_call.1
$region0: #{tpu_custom_call.1}
  #allocation0 [shape = 'u32[]', space=smem, size = 0x4, offset = 0x4, fixed_abs, tag = 'smem constant byte address 0x4 - core index']
  #allocation1 [shape = 'u32[144,128]{1,0:T(1,128)}', space=vmem, size = 0x12000, scoped, tag = 'internal scratch']
  %s0 = inlined_call_operand.hbm [shape: f32[1,512], index: 0, kind: input, shape index: {}]
  %s1 = inlined_call_operand.hbm [shape: f32[16,512], index: 1, kind: input, shape index: {}]
  %s2 = inlined_call_operand.hbm [shape: f32[16,128], index: 2, kind: output, shape index: {}]
  %s3 = sld [smem:[#allocation0]]
  $region49: #{tpu_custom_call.1} parent=0
    _
  %s5 = ssub.s32 1, %s3
  %s6 = scalar_select 0, %s5, %s3
  $region1: #{tpu_custom_call.1} parent=0
    #allocation2 [shape = 'u8[2048]{0}', space=vmem, size = 0x800, scoped, tag = 'input window, operand 0, single buffered']
    #allocation3 [shape = 's32[2]{0}', space=sflag, size = 0x8, scoped, tag = 'scoped memory for tpu_custom_call.1']
    #allocation4 [shape = 's32[2]{0}', space=sflag, size = 0x8, scoped, tag = 'scoped memory for tpu_custom_call.1']
    #allocation5 [shape = 'u8[32768]{0}', space=vmem, size = 0x8000, scoped, tag = 'input window, operand 1']
    #allocation6 [shape = 's32[2]{0}', space=sflag, size = 0x8, scoped, tag = 'scoped memory for tpu_custom_call.1']
    #allocation7 [shape = 'u8[8192]{0}', space=vmem, size = 0x2000, scoped, tag = 'output window, operand 0']
    %7 = vsyncpa [#allocation3], 0
    %8 = vsyncpa [#allocation6], 0
    %s9 = scalar_lea.sflag [#allocation6], 1
    %10 = vsyncpa %s9, 0
    %11 = vsyncpa [#allocation4], 0
    %s12 = scalar_lea.sflag [#allocation4], 1
    %13 = vsyncpa %s12, 0
    loop: start=0, step=1, limit=4
    $region2: #{tpu_custom_call.1} parent=1 // loop_pre_header
      _
    $region3: #{tpu_custom_call.1} parent=1 // loop_header
      %s15 = sphi 0, %s19
      %p16 = scmp.ge.s32.totalorder %s15, 4
      %s23 = sphi 0, %s23
      %s25 = sphi 0, %s23
      %s26 = sphi 0, %s25
      %s40 = sphi 0, %s26
      %s46 = sphi 0, %s48
      %s49 = sphi 0, %s46
      %s50 = sphi 0, %s49
      %s66 = sphi 0, %s50
      %s72 = sphi 0, %s74
      %s75 = sphi 0, %s72
      %s76 = sphi 0, %s75
      %s92 = sphi 0, %s76
    $region4: #{tpu_custom_call.1} parent=1 // loop_header_branch
      %18 = sbr.rel (%p16) target = $region8
    $region5: #{tpu_custom_call.1} parent=1 // loop_body
      %s20 = ssub.s32 %s15, 1
      %s21 = ssub.s32 %s15, 2
      %s22 = sadd.s32 %s15, 1
      %s24 = sadd.s32 %s23, 1
      %p27 = scmp.eq.s32.totalorder %s15, 1
      %p28 = scmp.ne.s32.totalorder %s23, %s25
      %p29 = scmp.eq.s32.totalorder %s15, 0
      %p30 = por %p28, %p29
      %p31 = scmp.ne.s32.totalorder %s23, %s25
      %p32 = scmp.eq.s32.totalorder %s20, 1
      %p33 = por %p31, %p32
      %p34 = scmp.ne.s32.totalorder %s25, %s26
      %p35 = scmp.eq.s32.totalorder %s20, 0
      %p36 = por %p34, %p35
      %p37 = scmp.ne.s32.totalorder %s25, %s26
      %p38 = scmp.eq.s32.totalorder %s21, 1
      %p39 = por %p37, %p38
      %p41 = scmp.ne.s32.totalorder %s26, %s40
      %p42 = scmp.eq.s32.totalorder %s21, 0
      %p43 = por %p41, %p42
      %s44 = ssub.s32 %s15, %s22
      %p45 = scmp.eq.s32.totalorder %s44, 0
      %s47 = sadd.s32 %s46, 1
      %s48 = scalar_select %p45, %s46, %s47
      %p51 = pneg %p45
      %p52 = scmp.eq.s32.totalorder %s15, 1
      %p53 = por %p51, %p52
      %p54 = scmp.ne.s32.totalorder %s46, %s49
      %p55 = scmp.eq.s32.totalorder %s15, 0
      %p56 = por %p54, %p55
      %p57 = scmp.ne.s32.totalorder %s46, %s49
      %p58 = scmp.eq.s32.totalorder %s20, 1
      %p59 = por %p57, %p58
      %p60 = scmp.ne.s32.totalorder %s49, %s50
      %p61 = scmp.eq.s32.totalorder %s20, 0
      %p62 = por %p60, %p61
      %p63 = scmp.ne.s32.totalorder %s49, %s50
      %p64 = scmp.eq.s32.totalorder %s21, 1
      %p65 = por %p63, %p64
      %p67 = scmp.ne.s32.totalorder %s50, %s66
      %p68 = scmp.eq.s32.totalorder %s21, 0
      %p69 = por %p67, %p68
      %s70 = ssub.s32 %s15, %s22
      %p71 = scmp.eq.s32.totalorder %s70, 0
      %s73 = sadd.s32 %s72, 1
      %s74 = scalar_select %p71, %s72, %s73
      %p77 = pneg %p71
      %p78 = scmp.eq.s32.totalorder %s15, 1
      %p79 = por %p77, %p78
      %p80 = scmp.ne.s32.totalorder %s72, %s75
      %p81 = scmp.eq.s32.totalorder %s15, 0
      %p82 = por %p80, %p81
      %p83 = scmp.ne.s32.totalorder %s72, %s75
      %p84 = scmp.eq.s32.totalorder %s20, 1
      %p85 = por %p83, %p84
      %p86 = scmp.ne.s32.totalorder %s75, %s76
      %p87 = scmp.eq.s32.totalorder %s20, 0
      %p88 = por %p86, %p87
      %p89 = scmp.ne.s32.totalorder %s75, %s76
      %p90 = scmp.eq.s32.totalorder %s21, 1
      %p91 = por %p89, %p90
      %p93 = scmp.ne.s32.totalorder %s76, %s92
      %p94 = scmp.eq.s32.totalorder %s21, 0
      %p95 = por %p93, %p94
      %p96 = scmp.le.s32.totalorder 1, %s15
      %p97 = scmp.lt.s32.totalorder %s15, 3
      %p98 = pnand %p96, %p97
      %p99 = pneg %p98
      // Predicated region
      $region9: #{tpu_custom_call.1} parent=5 // pred_check
        _
      $region10: #{tpu_custom_call.1} parent=5 // pred_check_branch
        %101 = sbr.rel (%p98) target = $region12
      $region11: #{tpu_custom_call.1} parent=5 // pred_region
        %s102 = ssub.s32 %s15, 1
        // Predicated region
        $region13: #{tpu_custom_call.1} parent=11 // pred_check
          %p103 = pneg %p36
        $region14: #{tpu_custom_call.1} parent=11 // pred_check_branch
          %105 = sbr.rel (%p103) target = $region16
        $region15: #{tpu_custom_call.1} parent=11 // pred_region
          %s107 = ssub.s32 64, 64
          %108 = vsyncadd [#allocation3], %s107
          %s110 = sshll.u32 [#allocation2], 4
          %s111 = int_to_ptr.vmem [resolvable:$true] %s110
          %113 = dma.hbm_to_vmem [thread:$0]  %s0, 64, %s111, [#allocation3]
        $region16: #{tpu_custom_call.1} parent=11 // pred_fallthru
          _
      $region12: #{tpu_custom_call.1} parent=5 // pred_fallthru
        _
      %p114 = scmp.lt.s32.totalorder %s15, 2
      // Predicated region
      $region17: #{tpu_custom_call.1} parent=5 // pred_check
        %p115 = pneg %p114
      $region18: #{tpu_custom_call.1} parent=5 // pred_check_branch
        %117 = sbr.rel (%p115) target = $region20
      $region19: #{tpu_custom_call.1} parent=5 // pred_region
        // Predicated region
        $region21: #{tpu_custom_call.1} parent=19 // pred_check
          %p118 = pneg %p56
        $region22: #{tpu_custom_call.1} parent=19 // pred_check_branch
          %120 = sbr.rel (%p118) target = $region24
        $region23: #{tpu_custom_call.1} parent=19 // pred_region
          %s121 = sand.u32 %s46, 1
          %s122 = scalar_lea.sflag [#allocation6], %s121
          %s123 = sand.u32 %s46, 1
          %s124 = smul.addr %s123, 32
          %s125 = scalar_lea.vmem [#allocation5], %s124
          %s127 = ssub.s32 512, 512
          %128 = vsyncadd %s122, %s127
          %s129 = smul.addr %s15, 4
          %s130 = smul.addr %s129, 128
          %s131 = scalar_lea.hbm %s1, %s130
          %s133 = sshll.u32 %s125, 4
          %s134 = int_to_ptr.vmem [resolvable:$true] %s133
          %136 = dma.hbm_to_vmem [thread:$0]  %s131, 512, %s134, %s122
        $region24: #{tpu_custom_call.1} parent=19 // pred_fallthru
          _
      $region20: #{tpu_custom_call.1} parent=5 // pred_fallthru
        _
      %p137 = scmp.le.s32.totalorder 1, %s15
      %p138 = scmp.lt.s32.totalorder %s15, 3
      %p139 = pnand %p137, %p138
      %p140 = pneg %p139
      // Predicated region
      $region25: #{tpu_custom_call.1} parent=5 // pred_check
        _
      $region26: #{tpu_custom_call.1} parent=5 // pred_check_branch
        %142 = sbr.rel (%p139) target = $region28
      $region27: #{tpu_custom_call.1} parent=5 // pred_region
        %s143 = ssub.s32 %s15, 1
        // Predicated region
        $region29: #{tpu_custom_call.1} parent=27 // pred_check
          %p144 = pneg %p36
        $region30: #{tpu_custom_call.1} parent=27 // pred_check_branch
          %146 = sbr.rel (%p144) target = $region32
        $region31: #{tpu_custom_call.1} parent=27 // pred_region
          %147 = dma.done [#allocation3], 64
        $region32: #{tpu_custom_call.1} parent=27 // pred_fallthru
          _
        %s148 = sand.u32 %s49, 1
        %s149 = scalar_lea.sflag [#allocation6], %s148
        %s150 = sand.u32 %s49, 1
        %s151 = smul.addr %s150, 32
        %s152 = scalar_lea.vmem [#allocation5], %s151
        // Predicated region
        $region33: #{tpu_custom_call.1} parent=27 // pred_check
          %p153 = pneg %p62
        $region34: #{tpu_custom_call.1} parent=27 // pred_check_branch
          %155 = sbr.rel (%p153) target = $region36
        $region35: #{tpu_custom_call.1} parent=27 // pred_region
          %156 = dma.done %s149, 512
        $region36: #{tpu_custom_call.1} parent=27 // pred_fallthru
          _
        %p157 = pneg %p36
        %p158 = pneg %p33
        %s159 = sand.u32 %s49, 1
        %s160 = scalar_lea.sflag [#allocation6], %s159
        %s161 = sand.u32 %s49, 1
        %s162 = smul.addr %s161, 32
        %s163 = scalar_lea.vmem [#allocation5], %s162
        %p164 = pneg %p62
        %p165 = pneg %p59
        %p166 = pneg %p88
        %p167 = pneg %p85
        %s168 = sand.u32 %s75, 1
        %s169 = scalar_lea.sflag [#allocation4], %s168
        %s170 = sand.u32 %s75, 1
        %s171 = smul.addr %s170, 8
        %s172 = scalar_lea.vmem [#allocation7], %s171
        %v173 = vld [vmem:[#allocation2] sm:$0x1]
        %v174 = vld [vmem:[#allocation2 + $0x1] sm:$0x1]
        %v175 = vld [vmem:[#allocation2 + $0x2] sm:$0x1]
        %v176 = vld [vmem:[#allocation2 + $0x3] sm:$0x1]
        %v177 = vmax.f32 %v173, %v174
        %v178 = vmax.f32 %v177, %v175
        %v179 = vmax.f32 %v178, %v176
        %v180 = vsub.f32 %v173, %v179
        %v181 = vmul.f32 %v180, 1.442695
        %v182 = vpow.pop %v181
        %v183 = vsub.f32 %v174, %v179
        %v184 = vmul.f32 %v183, 1.442695
        %v185 = vpow.pop %v184
        %v186 = vsub.f32 %v175, %v179
        %v187 = vmul.f32 %v186, 1.442695
        %v188 = vpow.pop %v187
        %v189 = vsub.f32 %v176, %v179
        %v190 = vmul.f32 %v189, 1.442695
        %v191 = vpow.pop %v190
        %v192 = vadd.f32 %v182, %v185
        %v193 = vadd.f32 %v192, %v188
        %v194 = vadd.f32 %v193, %v191
        %v195 = vrcp.pop %v194
        %v196 = vmul.f32 1.0, %v195
        %v197 = vmul.f32 %v182, %v196
        %v198 = vmul.f32 %v185, %v196
        %v199 = vmul.f32 %v188, %v196
        %v200 = vmul.f32 %v191, %v196
        %v201 = vld [vmem:[%s152] sm:$0xff]
        %v203 = vlaneseq
        %v204 = vshrl.u32 %v203, 7
        %v205 = vsub.s32 0, %v204
        %v206 = vrot.slane %v197, %v205
        %v208 = vmul.f32 %v206, %v201
        %v209 = vadd.f32 %v208, 0.0
        %v210 = vld [vmem:[%s152 + $0x8] sm:$0xff]
        %v212 = vlaneseq
        %v213 = vshrl.u32 %v212, 7
        %v214 = vsub.s32 0, %v213
        %v215 = vrot.slane %v198, %v214
        %v217 = vmul.f32 %v215, %v210
        %v218 = vadd.f32 %v209, %v217
        %v219 = vld [vmem:[%s152 + $0x10] sm:$0xff]
        %v221 = vlaneseq
        %v222 = vshrl.u32 %v221, 7
        %v223 = vsub.s32 0, %v222
        %v224 = vrot.slane %v199, %v223
        %v226 = vmul.f32 %v224, %v219
        %v227 = vadd.f32 %v218, %v226
        %v228 = vld [vmem:[%s152 + $0x18] sm:$0xff]
        %v230 = vlaneseq
        %v231 = vshrl.u32 %v230, 7
        %v232 = vsub.s32 0, %v231
        %v233 = vrot.slane %v200, %v232
        %v235 = vmul.f32 %v233, %v228
        %v236 = vadd.f32 %v227, %v235
        %237 = vst [vmem:[%s172] sm:$0xff] %v236
        %s238 = sand.u32 %s75, 1
        %s239 = scalar_lea.sflag [#allocation4], %s238
        %s240 = sand.u32 %s75, 1
        %s241 = smul.addr %s240, 8
        %s242 = scalar_lea.vmem [#allocation7], %s241
        // Predicated region
        $region37: #{tpu_custom_call.1} parent=27 // pred_check
          %p243 = pneg %p85
        $region38: #{tpu_custom_call.1} parent=27 // pred_check_branch
          %245 = sbr.rel (%p243) target = $region40
        $region39: #{tpu_custom_call.1} parent=27 // pred_region
          %s247 = ssub.s32 128, 128
          %248 = vsyncadd %s239, %s247
          %s249 = smul.addr %s20, 128
          %s250 = scalar_lea.hbm %s2, %s249
          %s252 = sshll.u32 %s242, 4
          %s253 = int_to_ptr.vmem [resolvable:$true] %s252
          %255 = dma.vmem_to_hbm [thread:$0]  %s253, 128, %s250, %s239
        $region40: #{tpu_custom_call.1} parent=27 // pred_fallthru
          _
      $region28: #{tpu_custom_call.1} parent=5 // pred_fallthru
        _
      %p256 = scmp.le.s32.totalorder 2, %s15
      // Predicated region
      $region41: #{tpu_custom_call.1} parent=5 // pred_check
        %p257 = pneg %p256
      $region42: #{tpu_custom_call.1} parent=5 // pred_check_branch
        %259 = sbr.rel (%p257) target = $region44
      $region43: #{tpu_custom_call.1} parent=5 // pred_region
        %s260 = ssub.s32 %s15, 2
        // Predicated region
        $region45: #{tpu_custom_call.1} parent=43 // pred_check
          %p261 = pneg %p91
        $region46: #{tpu_custom_call.1} parent=43 // pred_check_branch
          %263 = sbr.rel (%p261) target = $region48
        $region47: #{tpu_custom_call.1} parent=43 // pred_region
          %s264 = sand.u32 %s76, 1
          %s265 = scalar_lea.sflag [#allocation4], %s264
          %s266 = sand.u32 %s76, 1
          %s267 = smul.addr %s266, 8
          %s268 = scalar_lea.vmem [#allocation7], %s267
          %269 = dma.done %s265, 128
        $region48: #{tpu_custom_call.1} parent=43 // pred_fallthru
          _
      $region44: #{tpu_custom_call.1} parent=5 // pred_fallthru
        _
    $region6: #{tpu_custom_call.1} parent=1 // loop_footer
      %s19 = sadd.s32 1, %s15
    $region7: #{tpu_custom_call.1} parent=1 // loop_footer_branch
      %14 = sbr.rel target = $region3
    $region8: #{tpu_custom_call.1} parent=1 // loop_exit
      _
    %270 = vsyncpa [#allocation3], 1
    %s271 = scalar_lea.sflag [#allocation3], 1
    %272 = vsyncpa %s271, 1
    %273 = vsyncpa [#allocation6], 1
    %s274 = scalar_lea.sflag [#allocation6], 1
    %275 = vsyncpa %s274, 1
    %276 = vsyncpa [#allocation4], 1
    %s277 = scalar_lea.sflag [#allocation4], 1
    %278 = vsyncpa %s277, 1

</llo_original>
